<compile_context>
chip_gen: v6e
topology: v6e:2x2x1
jax: 0.10.0
libtpu: 0.0.40
codegen_flags: <defaults>
</compile_context>

<pallas_src>
import jax
import jax.numpy as jnp
import numpy as np
from jax.experimental import pallas as pl
from jax.experimental.pallas import tpu as pltpu

# ---------------- hyperparameters (consistent with the module) ---------------
INPUT_DIM = 16
HIDDEN = 32
BI = True                     # bidirectional LSTM
DROP = 0.0                    # dropout (inference -> identity)
KSIZE = 3
KSIZE2 = 3
STRIDE = 1
STRIDE2 = 1
PAD = 1                       # padding=1 hard-coded in the module
PAD2 = 1
C1 = 16                       # out_channels_first
C2 = 8                        # out_channels_second
LF = 4                        # linear_first
BATCH = 8

HALF = 128                    # one lane tile: holds one packed gate group
GATE_LANES = 2 * HALF         # fused gate-matmul width (256)
H2 = 2 * HIDDEN               # 64 = width of [fwd | bwd] hidden state

# Row offsets inside the single packed parameter array (all 8-aligned).
ROW_WG = 0                    # rows [0:16)   : fused gate weights (D, 256)
ROW_BG = 16                   # row 16        : fused gate bias (b_ih + b_hh)
ROW_WC = 24                   # row 24 + 8*j  : folded (conv1*conv2*lin1)^T row j (lanes 0:64)
ROW_SC = ROW_WC + 8 * LF      # row 56        : scalars [bc(4) | wl2(4) | bl2]
P_ROWS = ROW_SC + 8           # 64 rows total


# ---------------------------- Pallas kernel ----------------------------------
def rnn_cnn_kernel(x_ref, p_ref, out_ref):
    x = x_ref[...]                                            # (B, D)

    # ---- bidirectional single-step LSTM: one fused gate matmul --------------
    wg = p_ref[ROW_WG:ROW_WG + INPUT_DIM, :]                  # (D, 256)
    bg = p_ref[ROW_BG:ROW_BG + 1, :]                          # (1, 256)
    gates = jnp.dot(x, wg, preferred_element_type=jnp.float32) + bg   # (B, 256)

    sig = jax.nn.sigmoid(gates[:, 0:HALF])                    # [i_f|i_b|o_f|o_b]
    tg = jnp.tanh(gates[:, HALF:GATE_LANES])                  # [g_f|g_b| 0 | 0 ]
    o_al = pltpu.roll(sig, shift=H2, axis=1)                  # [o_f|o_b|i_f|i_b]
    # c = i*g (c0 = 0 -> forget gate is an exact no-op).
    # Pad lanes 64:128 give i * tanh(o * 0) = 0, so h = [h_fwd | h_bwd | 0 | 0].
    h = o_al * jnp.tanh(sig * tg)                             # (B, 128)

    # ---- folded conv1∘conv2∘lin1 + ReLU, then lin2 + sigmoid (VPU/XLU only) --
    sc = p_ref[ROW_SC:ROW_SC + 1, :]                          # (1, 256) scalar row
    acc = jnp.zeros((x.shape[0], 1), jnp.float32)
    for j in range(LF):                                       # LF = 4, unrolled at trace
        wj = p_ref[ROW_WC + 8 * j:ROW_WC + 8 * j + 1, 0:HALF]  # (1, 128), zero past lane 64
        zj = jnp.maximum(jnp.sum(h * wj, axis=1, keepdims=True) + sc[:, j:j + 1], 0.0)
        acc = acc + zj * sc[:, LF + j:LF + j + 1]
    out_ref[...] = jax.nn.sigmoid(acc + sc[:, 2 * LF:2 * LF + 1])


def rnn_cnn_forward(x, packed_params):
    b = x.shape[0]
    cost = pl.CostEstimate(
        flops=2 * b * INPUT_DIM * GATE_LANES            # fused gate matmul
        + 8 * b * HALF                                  # gate elementwise
        + LF * (2 * b * HALF + 3 * b),                  # folded affine + lin2
        transcendentals=b * (3 * HALF + 1),             # sigmoid/tanh lanes + final sigmoid
        bytes_accessed=x.size * 4 + packed_params.size * 4 + b * 4,
    )
    return pl.pallas_call(
        rnn_cnn_kernel,
        out_shape=jax.ShapeDtypeStruct((b, 1), jnp.float32),
        in_specs=[pl.BlockSpec(memory_space=pltpu.MemorySpace.VMEM)] * 2,
        out_specs=pl.BlockSpec(memory_space=pltpu.MemorySpace.VMEM),
        cost_estimate=cost,
    )(x, packed_params)
    # TODO(synk): for very large batches on v7x, add grid=(B//TILE_B,) with
    # dimension_semantics=("parallel",) to shard rows across both TensorCores.


# ------------------------- parameter construction ----------------------------
def init_params(key):
    ks = jax.random.split(key, 16)
    u = lambda k, shape, s=0.2: jax.random.uniform(k, shape, jnp.float32, -s, s)

    p = {}
    # LSTM (bidirectional): PyTorch shapes weight_ih (4H, D), biases (4H,)
    p["w_ih_f"] = u(ks[0], (4 * HIDDEN, INPUT_DIM))
    p["w_hh_f"] = u(ks[1], (4 * HIDDEN, HIDDEN))    # unused (h0 = 0), kept for shape parity
    p["b_ih_f"] = u(ks[2], (4 * HIDDEN,))
    p["b_hh_f"] = u(ks[3], (4 * HIDDEN,))
    p["w_ih_b"] = u(ks[4], (4 * HIDDEN, INPUT_DIM))
    p["w_hh_b"] = u(ks[5], (4 * HIDDEN, HIDDEN))    # unused (h0 = 0)
    p["b_ih_b"] = u(ks[6], (4 * HIDDEN,))
    p["b_hh_b"] = u(ks[7], (4 * HIDDEN,))
    # Conv1d layers (full PyTorch shapes)
    p["conv1_w"] = u(ks[8], (C1, 2 * HIDDEN, KSIZE))
    p["conv1_b"] = u(ks[9], (C1,))
    p["conv2_w"] = u(ks[10], (C2, C1, KSIZE2))
    p["conv2_b"] = u(ks[11], (C2,))
    # Linear layers
    p["lin1_w"] = u(ks[12], (LF, C2))
    p["lin1_b"] = u(ks[13], (LF,))
    p["lin2_w"] = u(ks[14], (1, LF))
    p["lin2_b"] = u(ks[15], (1,))
    return p


def pack_kernel_params(p):
    """Fold & pack all PyTorch-shaped params into ONE (P_ROWS, 256) f32 array."""
    # The conv1->conv2->lin1 fold is exact ONLY for this configuration
    # (length-1 input, k=3, stride=1, padding=1, no activation in between).
    assert KSIZE == 3 and KSIZE2 == 3 and STRIDE == 1 and STRIDE2 == 1
    assert PAD == 1 and PAD2 == 1
    assert 4 * HIDDEN == HALF and 2 * HIDDEN == H2

    H, D = HIDDEN, INPUT_DIM
    f32 = np.float32
    pn = {k: np.asarray(v, f32) for k, v in p.items()}

    def gate_w(w_ih, idx):          # (D, H); PyTorch gate order is i, f, g, o
        return pn[w_ih][idx * H:(idx + 1) * H, :].T

    def gate_b(b_ih, b_hh, idx):    # (H,) combined bias
        return (pn[b_ih] + pn[b_hh])[idx * H:(idx + 1) * H]

    out = np.zeros((P_ROWS, GATE_LANES), f32)

    # group A (lanes 0:128) = [i_fwd | i_bwd | o_fwd | o_bwd]
    out[ROW_WG:ROW_WG + D, 0 * H:1 * H] = gate_w("w_ih_f", 0)
    out[ROW_WG:ROW_WG + D, 1 * H:2 * H] = gate_w("w_ih_b", 0)
    out[ROW_WG:ROW_WG + D, 2 * H:3 * H] = gate_w("w_ih_f", 3)
    out[ROW_WG:ROW_WG + D, 3 * H:4 * H] = gate_w("w_ih_b", 3)
    # group B (lanes 128:192) = [g_fwd | g_bwd]; lanes 192:256 MUST stay zero
    out[ROW_WG:ROW_WG + D, HALF + 0 * H:HALF + 1 * H] = gate_w("w_ih_f", 2)
    out[ROW_WG:ROW_WG + D, HALF + 1 * H:HALF + 2 * H] = gate_w("w_ih_b", 2)

    out[ROW_BG, 0 * H:1 * H] = gate_b("b_ih_f", "b_hh_f", 0)
    out[ROW_BG, 1 * H:2 * H] = gate_b("b_ih_b", "b_hh_b", 0)
    out[ROW_BG, 2 * H:3 * H] = gate_b("b_ih_f", "b_hh_f", 3)
    out[ROW_BG, 3 * H:4 * H] = gate_b("b_ih_b", "b_hh_b", 3)
    out[ROW_BG, HALF + 0 * H:HALF + 1 * H] = gate_b("b_ih_f", "b_hh_f", 2)
    out[ROW_BG, HALF + 1 * H:HALF + 2 * H] = gate_b("b_ih_b", "b_hh_b", 2)

    # fold conv1 -> conv2 -> lin1 (centre tap only; no nonlinearity in between)
    W1 = pn["conv1_w"][:, :, KSIZE // 2].T          # (2H, C1)
    W2 = pn["conv2_w"][:, :, KSIZE2 // 2].T         # (C1, C2)
    Wl1 = pn["lin1_w"].T                            # (C2, LF)
    Wc = W1 @ W2 @ Wl1                              # (2H, LF)
    bc = (pn["conv1_b"] @ W2 + pn["conv2_b"]) @ Wl1 + pn["lin1_b"]   # (LF,)

    for j in range(LF):
        out[ROW_WC + 8 * j, 0:H2] = Wc[:, j]        # lanes 64:128 stay zero
    out[ROW_SC, 0:LF] = bc
    out[ROW_SC, LF:2 * LF] = pn["lin2_w"].reshape(LF)
    out[ROW_SC, 2 * LF] = pn["lin2_b"].reshape(())

    # The zero-pad regions must stay exactly zero for the roll/pad tricks to be exact.
    assert np.all(out[ROW_WG:ROW_BG + 1, HALF + H2:] == 0.0)
    assert np.all(out[ROW_WC:ROW_SC, H2:] == 0.0)
    return jnp.asarray(out)


# --------------------------- pure-JAX reference -------------------------------
def reference_forward(x, p):
    def lstm_dir(w_ih, b_ih, b_hh):
        gates = x @ w_ih.T + b_ih + b_hh               # W_hh @ h0 = 0
        i, f, g, o = jnp.split(gates, 4, axis=-1)
        i, o = jax.nn.sigmoid(i), jax.nn.sigmoid(o)
        g = jnp.tanh(g)
        c = i * g                                      # f * c0 = 0 exactly
        return o * jnp.tanh(c)

    h_f = lstm_dir(p["w_ih_f"], p["b_ih_f"], p["b_hh_f"])
    h_b = lstm_dir(p["w_ih_b"], p["b_ih_b"], p["b_hh_b"])
    lstm_out = jnp.concatenate([h_f, h_b], axis=-1)                      # (B, 2H)
    # conv1d on a length-1, zero-padded signal == matmul with the centre tap
    y1 = lstm_out @ p["conv1_w"][:, :, KSIZE // 2].T + p["conv1_b"]
    y2 = y1 @ p["conv2_w"][:, :, KSIZE2 // 2].T + p["conv2_b"]
    z = jnp.maximum(y2 @ p["lin1_w"].T + p["lin1_b"], 0.0)
    return jax.nn.sigmoid(z @ p["lin2_w"].T + p["lin2_b"])


# ------------------------------------ main ------------------------------------
if __name__ == "__main__":
    key = jax.random.PRNGKey(0)
    k_x, k_p = jax.random.split(key)
    x = jax.random.normal(k_x, (BATCH, INPUT_DIM), jnp.float32)

    params = init_params(k_p)
    packed = pack_kernel_params(params)

    out = jax.block_until_ready(rnn_cnn_forward(x, packed))
    ref = jax.block_until_ready(reference_forward(x, params))

    assert out.shape == (BATCH, 1), out.shape
    np.testing.assert_allclose(np.asarray(out), np.asarray(ref), rtol=1e-5, atol=1e-5)
    print("KERNEL_OK")
</pallas_src>

<mosaic_0001>
module attributes {stable_mosaic.version = 11 : i64} {
  func.func @rnn_cnn_kernel(%arg0: memref<8x16xf32, #tpu.memory_space<vmem>>, %arg1: memref<64x256xf32, #tpu.memory_space<vmem>>, %arg2: memref<8x1xf32, #tpu.memory_space<vmem>>) attributes {dimension_semantics = [], scalar_prefetch = 0 : i64, scratch_operands = 0 : i64, tpu.core_type = #tpu.core_type<tc>} {
    %c0 = arith.constant 0 : index
    %c0_0 = arith.constant 0 : index
    %0 = vector.load %arg0[%c0, %c0_0] : memref<8x16xf32, #tpu.memory_space<vmem>>, vector<8x16xf32>
    %c0_1 = arith.constant 0 : index
    %c0_2 = arith.constant 0 : index
    %1 = vector.load %arg1[%c0_1, %c0_2] : memref<64x256xf32, #tpu.memory_space<vmem>>, vector<16x256xf32>
    %c16 = arith.constant 16 : index
    %c0_3 = arith.constant 0 : index
    %2 = vector.load %arg1[%c16, %c0_3] : memref<64x256xf32, #tpu.memory_space<vmem>>, vector<1x256xf32>
    %cst = arith.constant dense<0.000000e+00> : vector<8x256xf32>
    %3 = tpu.matmul %0, %1, %cst {dimension_numbers = #tpu.dot_dimension_numbers<[1], [0], [0], [1], [0, 0, 1, 1], [], []>} : vector<8x16xf32>, vector<16x256xf32>, vector<8x256xf32> -> vector<8x256xf32>
    %4 = vector.broadcast %2 : vector<1x256xf32> to vector<8x256xf32>
    %5 = arith.addf %3, %4 : vector<8x256xf32>
    %6 = vector.extract_strided_slice %5 {offsets = [0, 0], sizes = [8, 128], strides = [1, 1]} : vector<8x256xf32> to vector<8x128xf32>
    %7 = arith.negf %6 : vector<8x128xf32>
    %8 = math.exp %7 : vector<8x128xf32>
    %cst_4 = arith.constant 1.000000e+00 : f32
    %9 = vector.broadcast %cst_4 : f32 to vector<8x128xf32>
    %10 = arith.addf %9, %8 : vector<8x128xf32>
    %11 = arith.divf %9, %10 : vector<8x128xf32>
    %12 = vector.extract_strided_slice %5 {offsets = [0, 128], sizes = [8, 128], strides = [1, 1]} : vector<8x256xf32> to vector<8x128xf32>
    %13 = math.tanh %12 : vector<8x128xf32>
    %c64_i32 = arith.constant 64 : i32
    %14 = tpu.dynamic_rotate %11 by %c64_i32 dim 1 : vector<8x128xf32>, i32 -> vector<8x128xf32>
    %15 = arith.mulf %11, %13 : vector<8x128xf32>
    %16 = math.tanh %15 : vector<8x128xf32>
    %17 = arith.mulf %14, %16 : vector<8x128xf32>
    %c56 = arith.constant 56 : index
    %c0_5 = arith.constant 0 : index
    %18 = vector.load %arg1[%c56, %c0_5] : memref<64x256xf32, #tpu.memory_space<vmem>>, vector<1x256xf32>
    %cst_6 = arith.constant 0.000000e+00 : f32
    %19 = vector.broadcast %cst_6 : f32 to vector<8x1xf32>
    %c24 = arith.constant 24 : index
    %c0_7 = arith.constant 0 : index
    %20 = vector.load %arg1[%c24, %c0_7] : memref<64x256xf32, #tpu.memory_space<vmem>>, vector<1x128xf32>
    %21 = vector.broadcast %20 : vector<1x128xf32> to vector<8x128xf32>
    %22 = arith.mulf %17, %21 : vector<8x128xf32>
    %cst_8 = arith.constant dense<0.000000e+00> : vector<8xf32>
    %23 = vector.multi_reduction <add>, %22, %cst_8 [1] : vector<8x128xf32> to vector<8xf32>
    %24 = vector.shape_cast %23 : vector<8xf32> to vector<8x1xf32>
    %25 = vector.extract_strided_slice %18 {offsets = [0, 0], sizes = [1, 1], strides = [1, 1]} : vector<1x256xf32> to vector<1x1xf32>
    %26 = vector.broadcast %25 : vector<1x1xf32> to vector<8x1xf32>
    %27 = arith.addf %24, %26 : vector<8x1xf32>
    %cst_9 = arith.constant 0.000000e+00 : f32
    %28 = vector.broadcast %cst_9 : f32 to vector<8x1xf32>
    %29 = arith.maximumf %27, %28 : vector<8x1xf32>
    %30 = vector.extract_strided_slice %18 {offsets = [0, 4], sizes = [1, 1], strides = [1, 1]} : vector<1x256xf32> to vector<1x1xf32>
    %31 = vector.broadcast %30 : vector<1x1xf32> to vector<8x1xf32>
    %32 = arith.mulf %29, %31 : vector<8x1xf32>
    %33 = arith.addf %19, %32 : vector<8x1xf32>
    %c32 = arith.constant 32 : index
    %c0_10 = arith.constant 0 : index
    %34 = vector.load %arg1[%c32, %c0_10] : memref<64x256xf32, #tpu.memory_space<vmem>>, vector<1x128xf32>
    %35 = vector.broadcast %34 : vector<1x128xf32> to vector<8x128xf32>
    %36 = arith.mulf %17, %35 : vector<8x128xf32>
    %cst_11 = arith.constant dense<0.000000e+00> : vector<8xf32>
    %37 = vector.multi_reduction <add>, %36, %cst_11 [1] : vector<8x128xf32> to vector<8xf32>
    %38 = vector.shape_cast %37 : vector<8xf32> to vector<8x1xf32>
    %39 = vector.extract_strided_slice %18 {offsets = [0, 1], sizes = [1, 1], strides = [1, 1]} : vector<1x256xf32> to vector<1x1xf32>
    %40 = vector.broadcast %39 : vector<1x1xf32> to vector<8x1xf32>
    %41 = arith.addf %38, %40 : vector<8x1xf32>
    %cst_12 = arith.constant 0.000000e+00 : f32
    %42 = vector.broadcast %cst_12 : f32 to vector<8x1xf32>
    %43 = arith.maximumf %41, %42 : vector<8x1xf32>
    %44 = vector.extract_strided_slice %18 {offsets = [0, 5], sizes = [1, 1], strides = [1, 1]} : vector<1x256xf32> to vector<1x1xf32>
    %45 = vector.broadcast %44 : vector<1x1xf32> to vector<8x1xf32>
    %46 = arith.mulf %43, %45 : vector<8x1xf32>
    %47 = arith.addf %33, %46 : vector<8x1xf32>
    %c40 = arith.constant 40 : index
    %c0_13 = arith.constant 0 : index
    %48 = vector.load %arg1[%c40, %c0_13] : memref<64x256xf32, #tpu.memory_space<vmem>>, vector<1x128xf32>
    %49 = vector.broadcast %48 : vector<1x128xf32> to vector<8x128xf32>
    %50 = arith.mulf %17, %49 : vector<8x128xf32>
    %cst_14 = arith.constant dense<0.000000e+00> : vector<8xf32>
    %51 = vector.multi_reduction <add>, %50, %cst_14 [1] : vector<8x128xf32> to vector<8xf32>
    %52 = vector.shape_cast %51 : vector<8xf32> to vector<8x1xf32>
    %53 = vector.extract_strided_slice %18 {offsets = [0, 2], sizes = [1, 1], strides = [1, 1]} : vector<1x256xf32> to vector<1x1xf32>
    %54 = vector.broadcast %53 : vector<1x1xf32> to vector<8x1xf32>
    %55 = arith.addf %52, %54 : vector<8x1xf32>
    %cst_15 = arith.constant 0.000000e+00 : f32
    %56 = vector.broadcast %cst_15 : f32 to vector<8x1xf32>
    %57 = arith.maximumf %55, %56 : vector<8x1xf32>
    %58 = vector.extract_strided_slice %18 {offsets = [0, 6], sizes = [1, 1], strides = [1, 1]} : vector<1x256xf32> to vector<1x1xf32>
    %59 = vector.broadcast %58 : vector<1x1xf32> to vector<8x1xf32>
    %60 = arith.mulf %57, %59 : vector<8x1xf32>
    %61 = arith.addf %47, %60 : vector<8x1xf32>
    %c48 = arith.constant 48 : index
    %c0_16 = arith.constant 0 : index
    %62 = vector.load %arg1[%c48, %c0_16] : memref<64x256xf32, #tpu.memory_space<vmem>>, vector<1x128xf32>
    %63 = vector.broadcast %62 : vector<1x128xf32> to vector<8x128xf32>
    %64 = arith.mulf %17, %63 : vector<8x128xf32>
    %cst_17 = arith.constant dense<0.000000e+00> : vector<8xf32>
    %65 = vector.multi_reduction <add>, %64, %cst_17 [1] : vector<8x128xf32> to vector<8xf32>
    %66 = vector.shape_cast %65 : vector<8xf32> to vector<8x1xf32>
    %67 = vector.extract_strided_slice %18 {offsets = [0, 3], sizes = [1, 1], strides = [1, 1]} : vector<1x256xf32> to vector<1x1xf32>
    %68 = vector.broadcast %67 : vector<1x1xf32> to vector<8x1xf32>
    %69 = arith.addf %66, %68 : vector<8x1xf32>
    %cst_18 = arith.constant 0.000000e+00 : f32
    %70 = vector.broadcast %cst_18 : f32 to vector<8x1xf32>
    %71 = arith.maximumf %69, %70 : vector<8x1xf32>
    %72 = vector.extract_strided_slice %18 {offsets = [0, 7], sizes = [1, 1], strides = [1, 1]} : vector<1x256xf32> to vector<1x1xf32>
    %73 = vector.broadcast %72 : vector<1x1xf32> to vector<8x1xf32>
    %74 = arith.mulf %71, %73 : vector<8x1xf32>
    %75 = arith.addf %61, %74 : vector<8x1xf32>
    %76 = vector.extract_strided_slice %18 {offsets = [0, 8], sizes = [1, 1], strides = [1, 1]} : vector<1x256xf32> to vector<1x1xf32>
    %77 = vector.broadcast %76 : vector<1x1xf32> to vector<8x1xf32>
    %78 = arith.addf %75, %77 : vector<8x1xf32>
    %79 = arith.negf %78 : vector<8x1xf32>
    %80 = math.exp %79 : vector<8x1xf32>
    %cst_19 = arith.constant 1.000000e+00 : f32
    %81 = vector.broadcast %cst_19 : f32 to vector<8x1xf32>
    %82 = arith.addf %81, %80 : vector<8x1xf32>
    %83 = arith.divf %81, %82 : vector<8x1xf32>
    %c0_20 = arith.constant 0 : index
    %c0_21 = arith.constant 0 : index
    %84 = vector.load %arg2[%c0_20, %c0_21] : memref<8x1xf32, #tpu.memory_space<vmem>>, vector<8x1xf32>
    tpu.vector_store %arg2[%c0_20, %c0_21], %83 {strides = array<i32>} : memref<8x1xf32, #tpu.memory_space<vmem>>, vector<8x1xf32>,
    return
  }
}

</mosaic_0001>

<llo_original>
// kernel: tpu_custom_call.1
$region0: #{tpu_custom_call.1}
  #allocation0 [shape = 'u32[]', space=smem, size = 0x4, offset = 0x4, fixed_abs, tag = 'smem constant byte address 0x4 - core index']
  #allocation1 [shape = 'u32[144,128]{1,0:T(1,128)}', space=vmem, size = 0x12000, scoped, tag = 'internal scratch']
  %s0 = inlined_call_operand.hbm [shape: f32[8,16], index: 0, kind: input, shape index: {}]
  %s1 = inlined_call_operand.hbm [shape: f32[64,256], index: 1, kind: input, shape index: {}]
  %s2 = inlined_call_operand.vmem [shape: f32[8,1], index: 2, kind: output, shape index: {}]
  %s3 = sld [smem:[#allocation0]]
  $region26: #{tpu_custom_call.1} parent=0
    _
  %s5 = ssub.s32 1, %s3
  %s6 = scalar_select 0, %s5, %s3
  $region1: #{tpu_custom_call.1} parent=0
    #allocation2 [shape = 'u8[4096]{0}', space=vmem, size = 0x1000, scoped, tag = 'input window, operand 0, single buffered']
    #allocation3 [shape = 's32[1]{0}', space=sflag, size = 0x4, scoped, tag = 'scoped memory for tpu_custom_call.1']
    #allocation4 [shape = 'u8[65536]{0}', space=vmem, size = 0x10000, scoped, tag = 'input window, operand 1, single buffered']
    #allocation5 [shape = 's32[1]{0}', space=sflag, size = 0x4, scoped, tag = 'scoped memory for tpu_custom_call.1']
    %7 = vsyncpa [#allocation3], 0
    %8 = vsyncpa [#allocation5], 0
    // Predicated region
    $region2: #{tpu_custom_call.1} parent=1 // pred_check
      _
    $region3: #{tpu_custom_call.1} parent=1 // pred_check_branch
      %10 = sbr.rel (0) target = $region5
    $region4: #{tpu_custom_call.1} parent=1 // pred_region
      %s12 = ssub.s32 128, 128
      %13 = vsyncadd [#allocation3], %s12
      %s15 = sshll.u32 [#allocation2], 4
      %s16 = int_to_ptr.vmem [resolvable:$true] %s15
      %18 = dma.hbm_to_vmem [thread:$0]  %s0, 128, %s16, [#allocation3]
    $region5: #{tpu_custom_call.1} parent=1 // pred_fallthru
      _
    // Predicated region
    $region6: #{tpu_custom_call.1} parent=1 // pred_check
      _
    $region7: #{tpu_custom_call.1} parent=1 // pred_check_branch
      %20 = sbr.rel (0) target = $region9
    $region8: #{tpu_custom_call.1} parent=1 // pred_region
      %s22 = ssub.s32 2048, 2048
      %23 = vsyncadd [#allocation5], %s22
      %s24 = sshll.u32 [#allocation4], 4
      %s25 = int_to_ptr.vmem [resolvable:$true] %s24
      %30 = dma.hbm_to_vmem [thread:$0]  %s1, 2048, %s25, [#allocation5], 256, 256, 16
    $region9: #{tpu_custom_call.1} parent=1 // pred_fallthru
      _
    // Predicated region
    $region10: #{tpu_custom_call.1} parent=1 // pred_check
      _
    $region11: #{tpu_custom_call.1} parent=1 // pred_check_branch
      %32 = sbr.rel (0) target = $region13
    $region12: #{tpu_custom_call.1} parent=1 // pred_region
      %33 = dma.done [#allocation3], 128
    $region13: #{tpu_custom_call.1} parent=1 // pred_fallthru
      _
    // Predicated region
    $region14: #{tpu_custom_call.1} parent=1 // pred_check
      _
    $region15: #{tpu_custom_call.1} parent=1 // pred_check_branch
      %35 = sbr.rel (0) target = $region17
    $region16: #{tpu_custom_call.1} parent=1 // pred_region
      %36 = dma.done [#allocation5], 2048
    $region17: #{tpu_custom_call.1} parent=1 // pred_fallthru
      _
    %v37 = vld [vmem:[#allocation2] sm:$0xff]
    %v38 = vld [vmem:[#allocation4] sm:$0xff]
    %v39 = vld [vmem:[#allocation4 + $0x8] sm:$0xff]
    %v40 = vld [vmem:[#allocation4 + $0x10] sm:$0xff]
    %v41 = vld [vmem:[#allocation4 + $0x18] sm:$0xff]
    %s42 = scalar_lea.vmem [#allocation4], 32
    %v43 = vld [vmem:[%s42] ss:$8 sm:$0x3]
    %v45 = vlaneseq
    %v46 = vshrl.u32 %v45, 7
    %v47 = vsub.s32 0, %v46
    %v48 = vrot.slane %v43, %v47
    %v49 = vlaneseq
    %v50 = vshrl.u32 %v49, 7
    %v51 = vsub.s32 1, %v50
    %v52 = vrot.slane %v43, %v51
    %vm55 = vcmask 130048
    %v57 = vsel %vm55, %v37, 0
    %59 = vmatprep.subr.mxu0 0.0
    %60 = vmatpush1.msra.mxu0 0.0
    %61 = vmatprep.subr.mxu0 0.0
    %62 = vmatpush1.msra.mxu0 0.0
    %63 = vmatprep.subr.mxu0 0.0
    %64 = vmatpush1.msra.mxu0 0.0
    %65 = vmatprep.subr.mxu0 0.0
    %66 = vmatpush1.msra.mxu0 0.0
    %67 = vmatprep.subr.mxu0 0.0
    %68 = vmatpush1.msra.mxu0 0.0
    %69 = vmatprep.subr.mxu0 0.0
    %70 = vmatpush1.msra.mxu0 0.0
    %71 = vmatprep.subr.mxu0 0.0
    %72 = vmatpush1.msra.mxu0 0.0
    %73 = vmatprep.subr.mxu0 0.0
    %74 = vmatpush1.msra.mxu0 0.0
    %75 = vmatprep.subr.mxu0 0.0
    %76 = vmatpush1.msra.mxu0 0.0
    %77 = vmatprep.subr.mxu0 0.0
    %78 = vmatpush1.msra.mxu0 0.0
    %79 = vmatprep.subr.mxu0 0.0
    %80 = vmatpush1.msra.mxu0 0.0
    %81 = vmatprep.subr.mxu0 0.0
    %82 = vmatpush1.msra.mxu0 0.0
    %83 = vmatprep.subr.mxu0 0.0
    %84 = vmatpush1.msra.mxu0 0.0
    %85 = vmatprep.subr.mxu0 0.0
    %86 = vmatpush1.msra.mxu0 0.0
    %87 = vmatprep.subr.mxu0 %v41
    %88 = vmatpush1.msra.mxu0 %v40
    %89 = vmatprep.subr.mxu0 %v39
    %90 = vmatpush1.msra.mxu0 %v38
    %91 = vmatprep.subr.mxu0 0.0
    %92 = vmatpush2.msra.mxu0 0.0
    %93 = vmatprep.subr.mxu0 0.0
    %94 = vmatpush2.msra.mxu0 0.0
    %95 = vmatprep.subr.mxu0 0.0
    %96 = vmatpush2.msra.mxu0 0.0
    %97 = vmatprep.subr.mxu0 0.0
    %98 = vmatpush2.msra.mxu0 0.0
    %99 = vmatprep.subr.mxu0 0.0
    %100 = vmatpush2.msra.mxu0 0.0
    %101 = vmatprep.subr.mxu0 0.0
    %102 = vmatpush2.msra.mxu0 0.0
    %103 = vmatprep.subr.mxu0 0.0
    %104 = vmatpush2.msra.mxu0 0.0
    %105 = vmatprep.subr.mxu0 0.0
    %106 = vmatpush2.msra.mxu0 0.0
    %107 = vmatprep.subr.mxu0 0.0
    %108 = vmatpush2.msra.mxu0 0.0
    %109 = vmatprep.subr.mxu0 0.0
    %110 = vmatpush2.msra.mxu0 0.0
    %111 = vmatprep.subr.mxu0 0.0
    %112 = vmatpush2.msra.mxu0 0.0
    %113 = vmatprep.subr.mxu0 0.0
    %114 = vmatpush2.msra.mxu0 0.0
    %115 = vmatprep.subr.mxu0 0.0
    %116 = vmatpush2.msra.mxu0 0.0
    %117 = vmatprep.subr.mxu0 0.0
    %118 = vmatpush2.msra.mxu0 0.0
    %119 = vmatprep.subr.mxu0 0.0
    %120 = vmatpush2.msra.mxu0 0.0
    %121 = vmatprep.subr.mxu0 0.0
    %122 = vmatpush2.msra.mxu0 0.0
    %123 = vmatprep.mubr.f32.mxu0 0.0
    %124 = vmatmul.mubr.f32.gmra.mxu0 %v57
    %v125 = vpop.f32.mrf.mxu0
    %v126 = vadd.f32 %v48, %v125
    %v127 = vpop.f32.mrf.mxu0
    %v128 = vadd.f32 %v52, %v127
    %129 = vdwg.mxu0
    %v130 = vxor.u32 %v126, 2147483648
    %v131 = vmul.f32 %v130, 1.442695
    %v132 = vpow.pop %v131
    %v133 = vadd.f32 %v132, 1.0
    %v134 = vrcp.pop %v133
    %v135 = vmul.f32 1.0, %v134
    %v136 = vtanh.pop %v128
    %137 = vrot.lane.b32.xlu0 %v135, 64
    %v138 = vpop.permute.xlu0 %137
    %v139 = vmul.f32 %v135, %v136
    %v140 = vtanh.pop %v139
    %v141 = vmul.f32 %v138, %v140
    %s142 = scalar_lea.vmem [#allocation4], 112
    %v143 = vld [vmem:[%s142] ss:$8 sm:$0x3]
    %v144 = vld [vmem:[#allocation4 + $0x30] ss:$0 sm:$0xff]
    %v145 = vmul.f32 %v141, %v144
    %146 = vadd.xlane.f32.xlu0 %v145
    %v147 = vpop.xlane.xlu0 %146
    %v149 = vlaneseq
    %v150 = vshrl.u32 %v149, 7
    %v151 = vsub.s32 0, %v150
    %v152 = vrot.slane %v143, %v151
    %v154 = vadd.f32 %v147, %v152
    %v155 = vmax.f32 %v154, 0.0
    %156 = vrot.lane.b32.xlu0 %v152, 124
    %v157 = vpop.permute.xlu0 %156
    %v159 = vmul.f32 %v155, %v157
    %v160 = vadd.f32 %v159, 0.0
    %v161 = vld [vmem:[#allocation4 + $0x40] ss:$0 sm:$0xff]
    %v162 = vmul.f32 %v141, %v161
    %163 = vadd.xlane.f32.xlu0 %v162
    %v164 = vpop.xlane.xlu0 %163
    %v165 = vadd.f32 %v164, %v152
    %v166 = vmax.f32 %v165, 0.0
    %v167 = vmul.f32 %v166, %v157
    %169 = vrot.lane.b32.xlu0 %v167, 127
    %v170 = vpop.permute.xlu0 %169
    %v172 = vadd.f32 %v160, %v170
    %v173 = vld [vmem:[#allocation4 + $0x50] ss:$0 sm:$0xff]
    %v174 = vmul.f32 %v141, %v173
    %175 = vadd.xlane.f32.xlu0 %v174
    %v176 = vpop.xlane.xlu0 %175
    %v177 = vadd.f32 %v176, %v152
    %v178 = vmax.f32 %v177, 0.0
    %v179 = vmul.f32 %v178, %v157
    %181 = vrot.lane.b32.xlu0 %v179, 126
    %v182 = vpop.permute.xlu0 %181
    %v184 = vadd.f32 %v172, %v182
    %v185 = vld [vmem:[#allocation4 + $0x60] ss:$0 sm:$0xff]
    %v186 = vmul.f32 %v141, %v185
    %187 = vadd.xlane.f32.xlu0 %v186
    %v188 = vpop.xlane.xlu0 %187
    %v189 = vadd.f32 %v188, %v152
    %v190 = vmax.f32 %v189, 0.0
    %v191 = vmul.f32 %v190, %v157
    %193 = vrot.lane.b32.xlu0 %v191, 125
    %v194 = vpop.permute.xlu0 %193
    %v196 = vadd.f32 %v184, %v194
    %197 = vrot.lane.b32.xlu0 %v152, 120
    %v198 = vpop.permute.xlu0 %197
    %v200 = vadd.f32 %v196, %v198
    %v201 = vxor.u32 %v200, 2147483648
    %v202 = vmul.f32 %v201, 1.442695
    %v203 = vpow.pop %v202
    %v204 = vadd.f32 %v203, 1.0
    %v205 = vrcp.pop %v204
    %v206 = vmul.f32 1.0, %v205
    %vm207 = vcmask 7168
    %208 = vst.msk [vmem:[%s2] sm:$0xff] %vm207, %v206
    // Predicated region
    $region18: #{tpu_custom_call.1} parent=1 // pred_check
      _
    $region19: #{tpu_custom_call.1} parent=1 // pred_check_branch
      %210 = sbr.rel (0) target = $region21
    $region20: #{tpu_custom_call.1} parent=1 // pred_region
      _
    $region21: #{tpu_custom_call.1} parent=1 // pred_fallthru
      _
    // Predicated region
    $region22: #{tpu_custom_call.1} parent=1 // pred_check
      _
    $region23: #{tpu_custom_call.1} parent=1 // pred_check_branch
      %212 = sbr.rel (0) target = $region25
    $region24: #{tpu_custom_call.1} parent=1 // pred_region
      _
    $region25: #{tpu_custom_call.1} parent=1 // pred_fallthru
      _
    %213 = vsyncpa [#allocation3], 1
    %214 = vsyncpa [#allocation5], 1

</llo_original>
